<compile_context>
chip_gen: v7x
topology: tpu7x:2x2x1
jax: 0.10.0
libtpu: 0.0.40
codegen_flags: <defaults>
</compile_context>

<pallas_src>
import jax
import jax.numpy as jnp
from jax.experimental import pallas as pl
from jax.experimental.pallas import tpu as pltpu


def _attention_layer_kernel(f1_ref, f2_ref, w_ref, f1e_ref, f2e_ref, att_ref):
    # f1_ref: (NB, L*D), f2_ref: (NB, T*D), w_ref: (1, D)   — all lane-dense.
    nb = f1_ref.shape[0]
    D = w_ref.shape[1]
    L = f1_ref.shape[1] // D
    T = f2_ref.shape[1] // D

    # Elementwise ReLU on full-lane slabs, vectorized over the whole NB tile.
    f1_flat = jnp.maximum(f1_ref[...], 0.0)                 # (NB, L*D)
    f2_flat = jnp.maximum(f2_ref[...], 0.0)                 # (NB, T*D)
    f1e_ref[...] = f1_flat                                  # lane-dense store

    # Structured view only for the small per-row math (possible VMEM relayout;
    # the kernel is DMA-bound so this compute is free filler).
    f1s = f1_flat.reshape(nb, L, D)                         # (NB, L, D)
    w = w_ref[...].reshape(1, 1, D)                         # (1, 1, D)

    # fc(f1e[l] + f2e[t]) = f1e[l]·w + (f2e[t]·w + b).  The second term is
    # constant over the softmax axis L and cancels exactly, so every t shares
    # ONE attention row per batch element.  VPU mul + lane reduce (no MXU).
    z = jnp.sum(f1s * w, axis=-1)                           # (NB, L)
    z = z - jnp.max(z, axis=-1, keepdims=True)
    e = jnp.exp(z)
    att_row = e / jnp.sum(e, axis=-1, keepdims=True)        # exact division

    # f_hat[n, d] = sum_l att[n, l] * f1e[n, l, d] — batched VPU/XLU weighted
    # sum over the whole NB slab (a 1xLxD matmul would waste the MXU).
    fhat = jnp.sum(att_row[..., None] * f1s, axis=1)        # (NB, D)

    # Broadcast over T via lane concatenation so stores stay lane-dense.
    fhat_rep = jnp.concatenate([fhat] * T, axis=1)          # (NB, T*D)
    f2e_ref[...] = jnp.maximum(f2_flat + fhat_rep, 0.0)     # relu(f2e + f_hat)
    att_ref[...] = jnp.concatenate([att_row] * T, axis=1)   # flat (T, L) rows


_TARGET_STEP_BYTES = 8 * 1024 * 1024     # aim for >= ~8 MiB HBM traffic / step


def _vmem_info():
    """(working-set budget, physical VMEM capacity) in bytes, per generation."""
    try:
        cap = int(pltpu.get_tpu_info().vmem_capacity_bytes)   # 64 MiB v7x, 128 MiB v5e/v6e
    except Exception:
        cap = 64 * 1024 * 1024                                # conservative default
    # ~45% of physical for the double-buffered block working set, capped so
    # Mosaic internal scratch always has headroom.
    budget = max(8 * 1024 * 1024, min(int(cap * 0.45), 48 * 1024 * 1024))
    return budget, cap


def _choose_tile(N, L, T, D):
    """Pick the batch tile NB (need not divide N) and padded batch size."""
    budget, cap = _vmem_info()
    per_elem_io = 4 * (2 * (L * D + T * D) + T * L)   # HBM bytes per batch element
    per_elem_resident = 2 * per_elem_io               # double-buffered in + out
    nb_vmem = max(1, budget // per_elem_resident)
    nb_traffic = (_TARGET_STEP_BYTES + per_elem_io - 1) // per_elem_io
    nb = int(max(1, min(N, nb_vmem, nb_traffic)))
    if nb >= N:
        return N, N, cap                              # single big step
    # Balance steps and keep the block sublane dim a multiple of 8.
    steps = (N + nb - 1) // nb
    nb = (((N + steps - 1) // steps) + 7) // 8 * 8
    n_pad = steps * nb
    return nb, n_pad, cap


def attention_layer(feature_1, feature_2, weight, bias):
    """
    feature_1: (N, L, D) float32
    feature_2: (N, T, D) float32
    weight:    (1, D)    float32   (nn.Linear(D, 1).weight of Attention_1.fc)
    bias:      (1,)      float32   (nn.Linear(D, 1).bias)
    returns (feature_1_embbed (N,L,D), feature_2_embbed (N,T,D), att (N,T,L))
    """
    N, L, D = feature_1.shape
    N2, T, V = feature_2.shape
    assert D == V, "dimension of feature_1 and feature_2 not match"
    assert N == N2

    # The fc bias is constant over the softmax axis L and cancels exactly, so
    # it cannot affect any output — drop the operand entirely.
    del bias

    # Lane-dense flattened views (row-major collapse of trailing dims is free).
    f1_flat = feature_1.astype(jnp.float32).reshape(N, L * D)
    f2_flat = feature_2.astype(jnp.float32).reshape(N, T * D)
    w_row = weight.astype(jnp.float32).reshape(1, D)

    NB, n_pad, vmem_cap = _choose_tile(N, L, T, D)
    if n_pad != N:                                   # non-divisor NB: pad batch
        f1_flat = jnp.pad(f1_flat, ((0, n_pad - N), (0, 0)))
        f2_flat = jnp.pad(f2_flat, ((0, n_pad - N), (0, 0)))

    per_elem_io = 4 * (2 * (L * D + T * D) + T * L)
    vmem_limit = int(min(vmem_cap * 7 // 8,
                         max(32 * 1024 * 1024,
                             2 * NB * per_elem_io + 8 * 1024 * 1024)))

    grid = (n_pad // NB,)
    grid_spec = pltpu.PrefetchScalarGridSpec(
        num_scalar_prefetch=0,
        grid=grid,
        in_specs=[
            pl.BlockSpec((NB, L * D), lambda i: (i, 0)),   # feature_1 (flat)
            pl.BlockSpec((NB, T * D), lambda i: (i, 0)),   # feature_2 (flat)
            pl.BlockSpec((1, D), lambda i: (0, 0)),        # fc weight row
        ],
        out_specs=[
            pl.BlockSpec((NB, L * D), lambda i: (i, 0)),   # feature_1_embbed
            pl.BlockSpec((NB, T * D), lambda i: (i, 0)),   # feature_2_embbed
            pl.BlockSpec((NB, T * L), lambda i: (i, 0)),   # att (flat T*L)
        ],
    )

    f1e_flat, f2e_flat, att_flat = pl.pallas_call(
        _attention_layer_kernel,
        out_shape=(
            jax.ShapeDtypeStruct((n_pad, L * D), jnp.float32),
            jax.ShapeDtypeStruct((n_pad, T * D), jnp.float32),
            jax.ShapeDtypeStruct((n_pad, T * L), jnp.float32),
        ),
        grid_spec=grid_spec,
        compiler_params=pltpu.CompilerParams(
            dimension_semantics=("parallel",),
            vmem_limit_bytes=vmem_limit,
        ),
    )(f1_flat, f2_flat, w_row)

    f1e = f1e_flat[:N].reshape(N, L, D)
    f2e = f2e_flat[:N].reshape(N, T, D)
    att = att_flat[:N].reshape(N, T, L)
    return f1e, f2e, att


def _reference(feature_1, feature_2, weight, bias):
    # Pure-JAX reference mirroring the PyTorch Attention_layer graph literally.
    f1e = jnp.maximum(feature_1, 0.0)
    f2e = jnp.maximum(feature_2, 0.0)
    h = f1e[:, None, :, :] + f2e[:, :, None, :]                   # (N, T, L, D)
    att = jnp.einsum("ntld,d->ntl", h, weight[0]) + bias[0]       # (N, T, L)
    att = jax.nn.softmax(att, axis=2)
    f_hat = jnp.einsum("ntl,nld->ntd", att, f1e)                  # (N, T, D)
    f2e_out = jnp.maximum(f2e + f_hat, 0.0)
    return f1e, f2e_out, att


if __name__ == "__main__":
    key = jax.random.PRNGKey(0)
    N, L, T, D = 2, 8, 8, 32

    k1, k2, k3, k4 = jax.random.split(key, 4)
    feature_1 = jax.random.normal(k1, (N, L, D), dtype=jnp.float32)
    feature_2 = jax.random.normal(k2, (N, T, D), dtype=jnp.float32)

    # Deterministic nn.Linear(D, 1) init: uniform(-1/sqrt(D), 1/sqrt(D))
    bound = 1.0 / (D ** 0.5)
    weight = jax.random.uniform(k3, (1, D), minval=-bound, maxval=bound,
                                dtype=jnp.float32)
    bias = jax.random.uniform(k4, (1,), minval=-bound, maxval=bound,
                              dtype=jnp.float32)

    f1e, f2e, att = attention_layer(feature_1, feature_2, weight, bias)
    jax.block_until_ready((f1e, f2e, att))

    f1e_ref, f2e_ref, att_ref = _reference(feature_1, feature_2, weight, bias)
    assert jnp.allclose(f1e, f1e_ref, atol=1e-5, rtol=1e-5)
    assert jnp.allclose(f2e, f2e_ref, atol=1e-5, rtol=1e-5)
    assert jnp.allclose(att, att_ref, atol=1e-5, rtol=1e-5)

    print("KERNEL_OK")
</pallas_src>

<mosaic_0001>
module attributes {stable_mosaic.version = 11 : i64} {
  func.func @_attention_layer_kernel(%arg0: i32, %arg1: memref<2x256xf32, #tpu.memory_space<vmem>>, %arg2: memref<2x256xf32, #tpu.memory_space<vmem>>, %arg3: memref<1x32xf32, #tpu.memory_space<vmem>>, %arg4: memref<2x256xf32, #tpu.memory_space<vmem>>, %arg5: memref<2x256xf32, #tpu.memory_space<vmem>>, %arg6: memref<2x64xf32, #tpu.memory_space<vmem>>) attributes {dimension_semantics = [#tpu.dimension_semantics<parallel>], iteration_bounds = array<i64: 1>, scalar_prefetch = 0 : i64, scratch_operands = 0 : i64, tpu.core_type = #tpu.core_type<tc>, window_params = [{transform_indices = @transform_0, window_bounds = array<i64: 2, 256>}, {transform_indices = @transform_1, window_bounds = array<i64: 2, 256>}, {pipeline_mode = #tpu.pipeline_mode<synchronous>, transform_indices = @transform_2, window_bounds = array<i64: 1, 32>}, {transform_indices = @transform_3, window_bounds = array<i64: 2, 256>}, {transform_indices = @transform_4, window_bounds = array<i64: 2, 256>}, {transform_indices = @transform_5, window_bounds = array<i64: 2, 64>}]} {
    %c0 = arith.constant 0 : index
    %c0_0 = arith.constant 0 : index
    %0 = vector.load %arg1[%c0, %c0_0] : memref<2x256xf32, #tpu.memory_space<vmem>>, vector<2x256xf32>
    %cst = arith.constant 0.000000e+00 : f32
    %1 = vector.broadcast %cst : f32 to vector<2x256xf32>
    %2 = arith.maximumf %0, %1 : vector<2x256xf32>
    %c0_1 = arith.constant 0 : index
    %c0_2 = arith.constant 0 : index
    %3 = vector.load %arg2[%c0_1, %c0_2] : memref<2x256xf32, #tpu.memory_space<vmem>>, vector<2x256xf32>
    %cst_3 = arith.constant 0.000000e+00 : f32
    %4 = vector.broadcast %cst_3 : f32 to vector<2x256xf32>
    %5 = arith.maximumf %3, %4 : vector<2x256xf32>
    %c0_4 = arith.constant 0 : index
    %c0_5 = arith.constant 0 : index
    %6 = vector.load %arg4[%c0_4, %c0_5] : memref<2x256xf32, #tpu.memory_space<vmem>>, vector<2x256xf32>
    tpu.vector_store %arg4[%c0_4, %c0_5], %2 {strides = array<i32>} : memref<2x256xf32, #tpu.memory_space<vmem>>, vector<2x256xf32>,
    %7 = vector.shape_cast %2 : vector<2x256xf32> to vector<2x8x32xf32>
    %c0_6 = arith.constant 0 : index
    %c0_7 = arith.constant 0 : index
    %8 = vector.load %arg3[%c0_6, %c0_7] : memref<1x32xf32, #tpu.memory_space<vmem>>, vector<1x32xf32>
    %9 = vector.shape_cast %8 : vector<1x32xf32> to vector<1x1x32xf32>
    %10 = vector.broadcast %9 : vector<1x1x32xf32> to vector<2x8x32xf32>
    %11 = arith.mulf %7, %10 : vector<2x8x32xf32>
    %cst_8 = arith.constant dense<0.000000e+00> : vector<2x8xf32>
    %12 = vector.multi_reduction <add>, %11, %cst_8 [2] : vector<2x8x32xf32> to vector<2x8xf32>
    %cst_9 = arith.constant dense<0xFF800000> : vector<2xf32>
    %13 = vector.multi_reduction <maximumf>, %12, %cst_9 [1] : vector<2x8xf32> to vector<2xf32>
    %14 = vector.shape_cast %13 : vector<2xf32> to vector<2x1xf32>
    %15 = vector.broadcast %14 : vector<2x1xf32> to vector<2x8xf32>
    %16 = arith.subf %12, %15 : vector<2x8xf32>
    %17 = math.exp %16 : vector<2x8xf32>
    %cst_10 = arith.constant dense<0.000000e+00> : vector<2xf32>
    %18 = vector.multi_reduction <add>, %17, %cst_10 [1] : vector<2x8xf32> to vector<2xf32>
    %19 = vector.shape_cast %18 : vector<2xf32> to vector<2x1xf32>
    %20 = vector.broadcast %19 : vector<2x1xf32> to vector<2x8xf32>
    %21 = arith.divf %17, %20 : vector<2x8xf32>
    %22 = vector.shape_cast %21 : vector<2x8xf32> to vector<2x8x1xf32>
    %23 = vector.broadcast %22 : vector<2x8x1xf32> to vector<2x8x32xf32>
    %24 = arith.mulf %23, %7 : vector<2x8x32xf32>
    %cst_11 = arith.constant dense<0.000000e+00> : vector<2x32xf32>
    %25 = vector.multi_reduction <add>, %24, %cst_11 [1] : vector<2x8x32xf32> to vector<2x32xf32>
    %26 = tpu.concatenate %25, %25, %25, %25, %25, %25, %25, %25 in 1 : vector<2x32xf32>, vector<2x32xf32>, vector<2x32xf32>, vector<2x32xf32>, vector<2x32xf32>, vector<2x32xf32>, vector<2x32xf32>, vector<2x32xf32> -> vector<2x256xf32>
    %27 = arith.addf %5, %26 : vector<2x256xf32>
    %cst_12 = arith.constant 0.000000e+00 : f32
    %28 = vector.broadcast %cst_12 : f32 to vector<2x256xf32>
    %29 = arith.maximumf %27, %28 : vector<2x256xf32>
    %c0_13 = arith.constant 0 : index
    %c0_14 = arith.constant 0 : index
    %30 = vector.load %arg5[%c0_13, %c0_14] : memref<2x256xf32, #tpu.memory_space<vmem>>, vector<2x256xf32>
    tpu.vector_store %arg5[%c0_13, %c0_14], %29 {strides = array<i32>} : memref<2x256xf32, #tpu.memory_space<vmem>>, vector<2x256xf32>,
    %31 = tpu.concatenate %21, %21, %21, %21, %21, %21, %21, %21 in 1 : vector<2x8xf32>, vector<2x8xf32>, vector<2x8xf32>, vector<2x8xf32>, vector<2x8xf32>, vector<2x8xf32>, vector<2x8xf32>, vector<2x8xf32> -> vector<2x64xf32>
    %c0_15 = arith.constant 0 : index
    %c0_16 = arith.constant 0 : index
    %32 = vector.load %arg6[%c0_15, %c0_16] : memref<2x64xf32, #tpu.memory_space<vmem>>, vector<2x64xf32>
    tpu.vector_store %arg6[%c0_15, %c0_16], %31 {strides = array<i32>} : memref<2x64xf32, #tpu.memory_space<vmem>>, vector<2x64xf32>,
    return
  }
  func.func @transform_0(%arg0: i32) -> (i32, i32) {
    %c0_i32 = arith.constant 0 : i32
    %c0_i32_0 = arith.constant 0 : i32
    return %arg0, %c0_i32 : i32, i32
  }
  func.func @transform_1(%arg0: i32) -> (i32, i32) {
    %c0_i32 = arith.constant 0 : i32
    %c0_i32_0 = arith.constant 0 : i32
    return %arg0, %c0_i32 : i32, i32
  }
  func.func @transform_2(%arg0: i32) -> (i32, i32) {
    %c0_i32 = arith.constant 0 : i32
    %c0_i32_0 = arith.constant 0 : i32
    %c0_i32_1 = arith.constant 0 : i32
    return %c0_i32, %c0_i32_0 : i32, i32
  }
  func.func @transform_3(%arg0: i32) -> (i32, i32) {
    %c0_i32 = arith.constant 0 : i32
    %c0_i32_0 = arith.constant 0 : i32
    return %arg0, %c0_i32 : i32, i32
  }
  func.func @transform_4(%arg0: i32) -> (i32, i32) {
    %c0_i32 = arith.constant 0 : i32
    %c0_i32_0 = arith.constant 0 : i32
    return %arg0, %c0_i32 : i32, i32
  }
  func.func @transform_5(%arg0: i32) -> (i32, i32) {
    %c0_i32 = arith.constant 0 : i32
    %c0_i32_0 = arith.constant 0 : i32
    return %arg0, %c0_i32 : i32, i32
  }
}

</mosaic_0001>

<llo_original>
// kernel: tpu_custom_call.1
$region0: #{tpu_custom_call.1}
  #allocation0 [shape = 'u32[]', space=smem, size = 0x4, offset = 0x4, fixed_abs, tag = 'smem constant byte address 0x4 - core index']
  #allocation1 [shape = 'u32[144,128]{1,0:T(1,128)}', space=vmem, size = 0x12000, scoped, tag = 'internal scratch']
  %s0 = inlined_call_operand.hbm [shape: f32[2,256], index: 0, kind: input, shape index: {}]
  %s1 = inlined_call_operand.hbm [shape: f32[2,256], index: 1, kind: input, shape index: {}]
  %s2 = inlined_call_operand.vmem [shape: f32[1,32], index: 2, kind: input, shape index: {}]
  %s3 = inlined_call_operand.hbm [shape: f32[2,256], index: 3, kind: output, shape index: {0}]
  %s4 = inlined_call_operand.hbm [shape: f32[2,256], index: 4, kind: output, shape index: {1}]
  %s5 = inlined_call_operand.hbm [shape: f32[2,64], index: 5, kind: output, shape index: {2}]
  %6 = xla_tuple %s3, %s4, %s5
  %s7 = sld [smem:[#allocation0]]
  $region46: #{tpu_custom_call.1} parent=0
    _
  %s9 = ssub.s32 1, %s7
  %s10 = scalar_select 0, %s9, %s7
  $region1: #{tpu_custom_call.1} parent=0
    #allocation2 [shape = 'u8[2048]{0}', space=vmem, size = 0x800, scoped, tag = 'input window, operand 0, single buffered']
    #allocation3 [shape = 's32[1]{0}', space=sflag, size = 0x4, scoped, tag = 'scoped memory for tpu_custom_call.1']
    #allocation4 [shape = 's32[1]{0}', space=sflag, size = 0x4, scoped, tag = 'scoped memory for tpu_custom_call.1']
    #allocation5 [shape = 'u8[2048]{0}', space=vmem, size = 0x800, scoped, tag = 'input window, operand 1, single buffered']
    #allocation6 [shape = 's32[1]{0}', space=sflag, size = 0x4, scoped, tag = 'scoped memory for tpu_custom_call.1']
    #allocation7 [shape = 'u8[2048]{0}', space=vmem, size = 0x800, scoped, tag = 'output window, operand 0, single buffered']
    #allocation8 [shape = 'u8[2048]{0}', space=vmem, size = 0x800, scoped, tag = 'output window, operand 1, single buffered']
    #allocation9 [shape = 's32[1]{0}', space=sflag, size = 0x4, scoped, tag = 'scoped memory for tpu_custom_call.1']
    #allocation10 [shape = 'u8[1024]{0}', space=vmem, size = 0x400, scoped, tag = 'output window, operand 2, single buffered']
    %11 = vsyncpa [#allocation3], 0
    %12 = vsyncpa [#allocation6], 0
    %13 = vsyncpa [#allocation4], 0
    %14 = vsyncpa [#allocation9], 0
    // Predicated region
    $region2: #{tpu_custom_call.1} parent=1 // pred_check
      _
    $region3: #{tpu_custom_call.1} parent=1 // pred_check_branch
      %16 = sbr.rel (0) target = $region5
    $region4: #{tpu_custom_call.1} parent=1 // pred_region
      %s18 = ssub.s32 64, 64
      %19 = vsyncadd [#allocation3], %s18
      %s21 = sshll.u32 [#allocation2], 4
      %s22 = int_to_ptr.vmem [resolvable:$true] %s21
      %24 = dma.hbm_to_vmem [thread:$0]  %s0, 64, %s22, [#allocation3]
    $region5: #{tpu_custom_call.1} parent=1 // pred_fallthru
      _
    // Predicated region
    $region6: #{tpu_custom_call.1} parent=1 // pred_check
      _
    $region7: #{tpu_custom_call.1} parent=1 // pred_check_branch
      %26 = sbr.rel (0) target = $region9
    $region8: #{tpu_custom_call.1} parent=1 // pred_region
      %s28 = ssub.s32 64, 64
      %29 = vsyncadd [#allocation6], %s28
      %s31 = sshll.u32 [#allocation5], 4
      %s32 = int_to_ptr.vmem [resolvable:$true] %s31
      %34 = dma.hbm_to_vmem [thread:$0]  %s1, 64, %s32, [#allocation6]
    $region9: #{tpu_custom_call.1} parent=1 // pred_fallthru
      _
    // Predicated region
    $region10: #{tpu_custom_call.1} parent=1 // pred_check
      _
    $region11: #{tpu_custom_call.1} parent=1 // pred_check_branch
      %36 = sbr.rel (0) target = $region13
    $region12: #{tpu_custom_call.1} parent=1 // pred_region
      _
    $region13: #{tpu_custom_call.1} parent=1 // pred_fallthru
      _
    // Predicated region
    $region14: #{tpu_custom_call.1} parent=1 // pred_check
      _
    $region15: #{tpu_custom_call.1} parent=1 // pred_check_branch
      %38 = sbr.rel (0) target = $region17
    $region16: #{tpu_custom_call.1} parent=1 // pred_region
      %39 = dma.done [#allocation3], 64
    $region17: #{tpu_custom_call.1} parent=1 // pred_fallthru
      _
    // Predicated region
    $region18: #{tpu_custom_call.1} parent=1 // pred_check
      _
    $region19: #{tpu_custom_call.1} parent=1 // pred_check_branch
      %41 = sbr.rel (0) target = $region21
    $region20: #{tpu_custom_call.1} parent=1 // pred_region
      %42 = dma.done [#allocation6], 64
    $region21: #{tpu_custom_call.1} parent=1 // pred_fallthru
      _
    %v43 = vld [vmem:[#allocation2] sm:$0xf]
    %v44 = vmax.f32 %v43, 0.0
    %v45 = vld [vmem:[#allocation5] sm:$0xf]
    %v46 = vmax.f32 %v45, 0.0
    %47 = vst [vmem:[#allocation7] sm:$0xf] %v44
    %v49 = vrot.slane %v44, 2
    %51 = vrot.lane.b32.xlu0 %v44, 96
    %v52 = vpop.permute.xlu0 %51
    %v53 = vrot.slane %v52, 2
    %55 = vrot.lane.b32.xlu0 %v44, 64
    %v56 = vpop.permute.xlu0 %55
    %v57 = vrot.slane %v56, 2
    %59 = vrot.lane.b32.xlu0 %v44, 32
    %v60 = vpop.permute.xlu0 %59
    %v61 = vrot.slane %v60, 2
    %v66 = vcombine.low %v44, %v52
    %v68 = vunpack.c.l.s4 1934713408
    %v69 = vunpack.c.0.s8 %v68
    %v70 = vlaneseq
    %v71 = vshrl.u32 %v70, 7
    %v72 = vsub.s32 %v69, %v71
    %v73 = vrot.slane %v66, %v72
    %v74 = vcombine.high %v73, 0.0
    %v75 = vcombine.low %v56, %v60
    %v77 = vunpack.c.l.s4 1934713408
    %v78 = vunpack.c.0.s8 %v77
    %v79 = vlaneseq
    %v80 = vshrl.u32 %v79, 7
    %v81 = vsub.s32 %v78, %v80
    %v82 = vrot.slane %v75, %v81
    %v83 = vcombine.high %v82, 0.0
    %v84 = vcombine.low %v49, %v53
    %v86 = vunpack.c.l.s4 1934713408
    %v87 = vunpack.c.0.s8 %v86
    %v88 = vlaneseq
    %v89 = vshrl.u32 %v88, 7
    %v90 = vsub.s32 %v87, %v89
    %v91 = vrot.slane %v84, %v90
    %v92 = vcombine.high %v91, 0.0
    %v93 = vcombine.low %v57, %v61
    %v95 = vunpack.c.l.s4 1934713408
    %v96 = vunpack.c.0.s8 %v95
    %v97 = vlaneseq
    %v98 = vshrl.u32 %v97, 7
    %v99 = vsub.s32 %v96, %v98
    %v100 = vrot.slane %v93, %v99
    %v101 = vcombine.high %v100, 0.0
    %v102 = vld [vmem:[%s2] sm:$0x1]
    %v104 = vlaneseq
    %v105 = vshrl.u32 %v104, 7
    %v106 = vsub.s32 0, %v105
    %v107 = vrot.slane %v102, %v106
    %v108 = vcombine.high %v107, %v107
    %v110 = vunpack.c.l.s4 1983009808
    %v111 = vunpack.c.0.s8 %v110
    %v112 = vlaneseq
    %v113 = vshrl.u32 %v112, 7
    %v114 = vsub.s32 %v111, %v113
    %v115 = vrot.slane %v107, %v114
    %v117 = vunpack.c.l.s4 1983009808
    %v118 = vunpack.c.0.s8 %v117
    %v119 = vlaneseq
    %v120 = vshrl.u32 %v119, 7
    %v121 = vsub.s32 %v118, %v120
    %v122 = vrot.slane %v108, %v121
    %v123 = vcombine.high %v115, %v115
    %v124 = vcombine.high %v122, %v122
    %v129 = vmul.f32 %v73, %v115
    %v130 = vmul.f32 %v82, %v123
    %v131 = vmul.f32 %v91, %v122
    %v132 = vmul.f32 %v100, %v124
    %v133 = vmul.f32 %v74, %v115
    %v134 = vmul.f32 %v83, %v123
    %v135 = vmul.f32 %v92, %v122
    %v136 = vmul.f32 %v101, %v124
    %v145 = vcombine.low %v129, %v130
    %v146 = vcombine.low %v131, %v132
    %v148 = vunpack.c.l.s4 1983009808
    %v149 = vunpack.c.0.s8 %v148
    %v150 = vlaneseq
    %v151 = vshrl.u32 %v150, 7
    %v152 = vsub.s32 %v149, %v151
    %v153 = vrot.slane %v145, %v152
    %v155 = vunpack.c.l.s4 1983009808
    %v156 = vunpack.c.0.s8 %v155
    %v157 = vlaneseq
    %v158 = vshrl.u32 %v157, 7
    %v159 = vsub.s32 %v156, %v158
    %v160 = vrot.slane %v146, %v159
    %v161 = vcombine.low %v153, %v160
    %v162 = vcombine.low %v133, %v134
    %v163 = vcombine.low %v135, %v136
    %v165 = vunpack.c.l.s4 1983009808
    %v166 = vunpack.c.0.s8 %v165
    %v167 = vlaneseq
    %v168 = vshrl.u32 %v167, 7
    %v169 = vsub.s32 %v166, %v168
    %v170 = vrot.slane %v162, %v169
    %v172 = vunpack.c.l.s4 1983009808
    %v173 = vunpack.c.0.s8 %v172
    %v174 = vlaneseq
    %v175 = vshrl.u32 %v174, 7
    %v176 = vsub.s32 %v173, %v175
    %v177 = vrot.slane %v163, %v176
    %v178 = vcombine.low %v170, %v177
    %vm181 = vcmask 261120
    %v182 = vsel %vm181, %v161, 0.0
    %183 = vadd.xlane.f32.xlu0 %v182
    %v184 = vpop.xlane.xlu0 %183
    %v185 = vsel %vm181, %v178, 0.0
    %186 = vadd.xlane.f32.xlu0 %v185
    %v187 = vpop.xlane.xlu0 %186
    %v190 = vlaneseq
    %v191 = vand.u32 %v190, 127
    %v192 = vlaneseq
    %v193 = vshrl.u32 %v192, 7
    %v194 = vsub.s32 %v191, %v193
    %v195 = vrot.slane %v184, %v194
    %v196 = vlaneseq
    %v197 = vshrl.u32 %v196, 7
    %v198 = vsub.s32 %v191, %v197
    %v199 = vrot.slane %v187, %v198
    %vm200 = vcmask 1041409
    %v201 = vsel %vm200, %v199, %v195
    %vm203 = vcmask 58368
    %v204 = vsel %vm203, %v201, -inf
    %205 = vmax.xlane.f32.xlu0 %v204
    %v206 = vpop.xlane.xlu0 %205
    %v208 = vlaneseq
    %v209 = vshrl.u32 %v208, 7
    %v210 = vsub.s32 0, %v209
    %v211 = vrot.slane %v206, %v210
    %v212 = vlaneseq
    %v213 = vshrl.u32 %v212, 7
    %v214 = vsub.s32 1, %v213
    %v215 = vrot.slane %v206, %v214
    %v218 = vsub.f32 %v184, %v211
    %v219 = vsub.f32 %v187, %v215
    %v220 = vmul.f32 %v218, 1.442695
    %v221 = vpow.pop %v220
    %v222 = vmul.f32 %v219, 1.442695
    %v223 = vpow.pop %v222
    %226 = vset.pattern.permute.xlu0 0
    %227 = vperm.xlu0 %226, %v221
    %v228 = vpop.permute.xlu0 %227
    %229 = vset.pattern.permute.xlu0 0
    %230 = vperm.xlu0 %229, %v223
    %v231 = vpop.permute.xlu0 %230
    %v232 = vlaneseq
    %v233 = vshrl.u32 %v232, 7
    %v234 = vsub.s32 %v191, %v233
    %v235 = vrot.slane %v228, %v234
    %v236 = vlaneseq
    %v237 = vshrl.u32 %v236, 7
    %v238 = vsub.s32 %v191, %v237
    %v239 = vrot.slane %v231, %v238
    %v240 = vsel %vm200, %v239, %v235
    %v242 = vsel %vm203, %v240, 0.0
    %243 = vadd.xlane.f32.xlu0 %v242
    %v244 = vpop.xlane.xlu0 %243
    %v246 = vlaneseq
    %v247 = vshrl.u32 %v246, 7
    %v248 = vsub.s32 0, %v247
    %v249 = vrot.slane %v244, %v248
    %v250 = vlaneseq
    %v251 = vshrl.u32 %v250, 7
    %v252 = vsub.s32 1, %v251
    %v253 = vrot.slane %v244, %v252
    %v256 = vrcp.pop %v249
    %v257 = vmul.f32 %v221, %v256
    %v258 = vrcp.pop %v253
    %v259 = vmul.f32 %v223, %v258
    %261 = vset.pattern.permute.xlu0 0
    %262 = vperm.xlu0 %261, %v257
    %v263 = vpop.permute.xlu0 %262
    %266 = vset.pattern.permute.xlu0 0
    %267 = vperm.xlu0 %266, %v259
    %v268 = vpop.permute.xlu0 %267
    %v278 = vcombine.low %v73, %v82
    %v279 = vcombine.low %v91, %v100
    %v281 = vunpack.c.l.s4 1983009808
    %v282 = vunpack.c.0.s8 %v281
    %v283 = vlaneseq
    %v284 = vshrl.u32 %v283, 7
    %v285 = vsub.s32 %v282, %v284
    %v286 = vrot.slane %v278, %v285
    %v288 = vunpack.c.l.s4 1983009808
    %v289 = vunpack.c.0.s8 %v288
    %v290 = vlaneseq
    %v291 = vshrl.u32 %v290, 7
    %v292 = vsub.s32 %v289, %v291
    %v293 = vrot.slane %v279, %v292
    %v294 = vcombine.low %v286, %v293
    %v295 = vcombine.low %v74, %v83
    %v296 = vcombine.low %v92, %v101
    %v298 = vunpack.c.l.s4 1983009808
    %v299 = vunpack.c.0.s8 %v298
    %v300 = vlaneseq
    %v301 = vshrl.u32 %v300, 7
    %v302 = vsub.s32 %v299, %v301
    %v303 = vrot.slane %v295, %v302
    %v305 = vunpack.c.l.s4 1983009808
    %v306 = vunpack.c.0.s8 %v305
    %v307 = vlaneseq
    %v308 = vshrl.u32 %v307, 7
    %v309 = vsub.s32 %v306, %v308
    %v310 = vrot.slane %v296, %v309
    %v311 = vcombine.low %v303, %v310
    %v314 = vmul.f32 %v263, %v294
    %v315 = vmul.f32 %v268, %v311
    %v316 = vsel %vm181, %v314, 0.0
    %v317 = vrot.slane %v316, 4
    %v318 = vadd.f32 %v316, %v317
    %v319 = vrot.slane %v318, 2
    %v320 = vadd.f32 %v318, %v319
    %v321 = vrot.slane %v320, 1
    %v322 = vadd.f32 %v320, %v321
    %v323 = vsel %vm181, %v315, 0.0
    %v324 = vrot.slane %v323, 4
    %v325 = vadd.f32 %v323, %v324
    %v326 = vrot.slane %v325, 2
    %v327 = vadd.f32 %v325, %v326
    %v328 = vrot.slane %v327, 1
    %v329 = vadd.f32 %v327, %v328
    %v332 = vsel %vm200, %v329, %v322
    %334 = vrot.lane.b32.xlu0 %v332, 32
    %v335 = vpop.permute.xlu0 %334
    %337 = vrot.lane.b32.xlu0 %v332, 64
    %v338 = vpop.permute.xlu0 %337
    %340 = vrot.lane.b32.xlu0 %v332, 96
    %v341 = vpop.permute.xlu0 %340
    %v343 = vsel %vm181, %v332, %v335
    %vm344 = vcmask 523264
    %v345 = vsel %vm344, %v343, %v338
    %vm346 = vcmask 785408
    %v347 = vsel %vm346, %v345, %v341
    %v349 = vcombine.low %v347, %v347
    %v351 = vunpack.c.l.s4 1983009808
    %v352 = vunpack.c.0.s8 %v351
    %v353 = vlaneseq
    %v354 = vshrl.u32 %v353, 7
    %v355 = vsub.s32 %v352, %v354
    %v356 = vrot.slane %v349, %v355
    %v358 = vadd.f32 %v46, %v356
    %v359 = vmax.f32 %v358, 0.0
    %360 = vst [vmem:[#allocation8] sm:$0xf] %v359
    %v361 = vlaneseq
    %v362 = vshrl.u32 %v361, 7
    %v363 = vsub.s32 %v191, %v362
    %v364 = vrot.slane %v263, %v363
    %v365 = vlaneseq
    %v366 = vshrl.u32 %v365, 7
    %v367 = vsub.s32 %v191, %v366
    %v368 = vrot.slane %v268, %v367
    %v369 = vsel %vm200, %v368, %v364
    %v371 = vadd.s32 %v191, 4294967288
    %v372 = vlaneseq
    %v373 = vshrl.u32 %v372, 7
    %v374 = vsub.s32 %v371, %v373
    %v375 = vrot.slane %v263, %v374
    %v376 = vlaneseq
    %v377 = vshrl.u32 %v376, 7
    %v378 = vsub.s32 %v371, %v377
    %v379 = vrot.slane %v268, %v378
    %v380 = vsel %vm200, %v379, %v375
    %v382 = vadd.s32 %v191, 4294967280
    %v383 = vlaneseq
    %v384 = vshrl.u32 %v383, 7
    %v385 = vsub.s32 %v382, %v384
    %v386 = vrot.slane %v263, %v385
    %v387 = vlaneseq
    %v388 = vshrl.u32 %v387, 7
    %v389 = vsub.s32 %v382, %v388
    %v390 = vrot.slane %v268, %v389
    %v391 = vsel %vm200, %v390, %v386
    %v393 = vadd.s32 %v191, 4294967272
    %v394 = vlaneseq
    %v395 = vshrl.u32 %v394, 7
    %v396 = vsub.s32 %v393, %v395
    %v397 = vrot.slane %v263, %v396
    %v398 = vlaneseq
    %v399 = vshrl.u32 %v398, 7
    %v400 = vsub.s32 %v393, %v399
    %v401 = vrot.slane %v268, %v400
    %v402 = vsel %vm200, %v401, %v397
    %v404 = vadd.s32 %v191, 4294967264
    %v405 = vlaneseq
    %v406 = vshrl.u32 %v405, 7
    %v407 = vsub.s32 %v404, %v406
    %v408 = vrot.slane %v263, %v407
    %v409 = vlaneseq
    %v410 = vshrl.u32 %v409, 7
    %v411 = vsub.s32 %v404, %v410
    %v412 = vrot.slane %v268, %v411
    %v413 = vsel %vm200, %v412, %v408
    %v415 = vadd.s32 %v191, 4294967256
    %v416 = vlaneseq
    %v417 = vshrl.u32 %v416, 7
    %v418 = vsub.s32 %v415, %v417
    %v419 = vrot.slane %v263, %v418
    %v420 = vlaneseq
    %v421 = vshrl.u32 %v420, 7
    %v422 = vsub.s32 %v415, %v421
    %v423 = vrot.slane %v268, %v422
    %v424 = vsel %vm200, %v423, %v419
    %v426 = vadd.s32 %v191, 4294967248
    %v427 = vlaneseq
    %v428 = vshrl.u32 %v427, 7
    %v429 = vsub.s32 %v426, %v428
    %v430 = vrot.slane %v263, %v429
    %v431 = vlaneseq
    %v432 = vshrl.u32 %v431, 7
    %v433 = vsub.s32 %v426, %v432
    %v434 = vrot.slane %v268, %v433
    %v435 = vsel %vm200, %v434, %v430
    %v437 = vadd.s32 %v191, 4294967240
    %v438 = vlaneseq
    %v439 = vshrl.u32 %v438, 7
    %v440 = vsub.s32 %v437, %v439
    %v441 = vrot.slane %v263, %v440
    %v442 = vlaneseq
    %v443 = vshrl.u32 %v442, 7
    %v444 = vsub.s32 %v437, %v443
    %v445 = vrot.slane %v268, %v444
    %v446 = vsel %vm200, %v445, %v441
    %vm448 = vcmask 64512
    %v449 = vsel %vm448, %v369, %v380
    %vm450 = vcmask 130048
    %v451 = vsel %vm450, %v449, %v391
    %vm452 = vcmask 195584
    %v453 = vsel %vm452, %v451, %v402
    %v454 = vsel %vm181, %v453, %v413
    %vm455 = vcmask 326656
    %v456 = vsel %vm455, %v454, %v424
    %vm457 = vcmask 392192
    %v458 = vsel %vm457, %v456, %v435
    %vm459 = vcmask 457728
    %v460 = vsel %vm459, %v458, %v446
    %vm461 = vcmask 517120
    %462 = vst.msk [vmem:[#allocation10] sm:$0x3] %vm461, %v460
    // Predicated region
    $region22: #{tpu_custom_call.1} parent=1 // pred_check
      _
    $region23: #{tpu_custom_call.1} parent=1 // pred_check_branch
      %464 = sbr.rel (0) target = $region25
    $region24: #{tpu_custom_call.1} parent=1 // pred_region
      %s466 = ssub.s32 64, 64
      %467 = vsyncadd [#allocation4], %s466
      %s469 = sshll.u32 [#allocation7], 4
      %s470 = int_to_ptr.vmem [resolvable:$true] %s469
      %472 = dma.vmem_to_hbm [thread:$0]  %s470, 64, %s3, [#allocation4]
    $region25: #{tpu_custom_call.1} parent=1 // pred_fallthru
      _
    // Predicated region
    $region26: #{tpu_custom_call.1} parent=1 // pred_check
      _
    $region27: #{tpu_custom_call.1} parent=1 // pred_check_branch
      %474 = sbr.rel (0) target = $region29
    $region28: #{tpu_custom_call.1} parent=1 // pred_region
      %s476 = ssub.s32 64, 64
      %477 = vsyncadd [#allocation9], %s476
      %s479 = sshll.u32 [#allocation8], 4
      %s480 = int_to_ptr.vmem [resolvable:$true] %s479
      %482 = dma.vmem_to_hbm [thread:$0]  %s480, 64, %s4, [#allocation9]
    $region29: #{tpu_custom_call.1} parent=1 // pred_fallthru
      _
    // Predicated region
    $region30: #{tpu_custom_call.1} parent=1 // pred_check
      _
    $region31: #{tpu_custom_call.1} parent=1 // pred_check_branch
      %484 = sbr.rel (0) target = $region33
    $region32: #{tpu_custom_call.1} parent=1 // pred_region
      %s486 = ssub.s32 32, 32
      %487 = vsyncadd [#allocation9], %s486
      %s489 = sshll.u32 [#allocation10], 4
      %s490 = int_to_ptr.vmem [resolvable:$true] %s489
      %492 = dma.vmem_to_hbm [thread:$0]  %s490, 32, %s5, [#allocation9]
    $region33: #{tpu_custom_call.1} parent=1 // pred_fallthru
      _
    // Predicated region
    $region34: #{tpu_custom_call.1} parent=1 // pred_check
      _
    $region35: #{tpu_custom_call.1} parent=1 // pred_check_branch
      %494 = sbr.rel (0) target = $region37
    $region36: #{tpu_custom_call.1} parent=1 // pred_region
      %495 = dma.done [#allocation4], 64
    $region37: #{tpu_custom_call.1} parent=1 // pred_fallthru
      _
    // Predicated region
    $region38: #{tpu_custom_call.1} parent=1 // pred_check
      _
    $region39: #{tpu_custom_call.1} parent=1 // pred_check_branch
      %497 = sbr.rel (0) target = $region41
    $region40: #{tpu_custom_call.1} parent=1 // pred_region
      %498 = dma.done [#allocation9], 64
    $region41: #{tpu_custom_call.1} parent=1 // pred_fallthru
      _
    // Predicated region
    $region42: #{tpu_custom_call.1} parent=1 // pred_check
      _
    $region43: #{tpu_custom_call.1} parent=1 // pred_check_branch
      %500 = sbr.rel (0) target = $region45
    $region44: #{tpu_custom_call.1} parent=1 // pred_region
      %501 = dma.done [#allocation9], 32
    $region45: #{tpu_custom_call.1} parent=1 // pred_fallthru
      _
    %502 = vsyncpa [#allocation3], 1
    %503 = vsyncpa [#allocation6], 1
    %504 = vsyncpa [#allocation4], 1
    %505 = vsyncpa [#allocation9], 1

</llo_original>
